<compile_context>
chip_gen: v5e
topology: v5e:2x2
jax: 0.10.0
libtpu: 0.0.40
codegen_flags: <defaults>
</compile_context>

<pallas_src>
import functools

import jax
import jax.numpy as jnp
from jax.experimental import pallas as pl
from jax.experimental.pallas import tpu as pltpu

_LANES = 128


def _dice_partial_kernel(yp_ref, yt_ref, out_ref, acc_ref, *, rows):
    # yp_ref : (rows, 128) channel-1 logits tile for (batch b, split s)
    # yt_ref : (rows, 128) target tile
    # out_ref: (3, 8, 128) per-(b, s) partial sums [intersection, sum_pred, sum_true]
    # acc_ref: (3, 8, 128) f32 VMEM accumulator (vreg-sized; 12 KiB)
    r = pl.program_id(2)

    @pl.when(r == 0)
    def _():
        acc_ref[...] = jnp.zeros_like(acc_ref)

    x = yp_ref[...].astype(jnp.float32)
    # Sigmoid via tanh: one EUP push per vreg, overflow-free for x << 0.
    p = 0.5 * jnp.tanh(0.5 * x) + 0.5
    t = (yt_ref[...].astype(jnp.float32) > 0.5).astype(jnp.float32)

    groups = rows // 8

    def fold(a):
        # (rows, 128) -> (8, 128): layout-preserving reshape (groups whole
        # (8, 128) vreg tiles) + sum over the leading axis = pure VPU adds.
        return a.reshape(groups, 8, _LANES).sum(axis=0)

    acc_ref[0] += fold(p * t)
    acc_ref[1] += fold(p)
    acc_ref[2] += fold(t)

    @pl.when(r == pl.num_programs(2) - 1)
    def _():
        # Plain unmasked vreg store; no in-kernel cross-sublane reduction.
        out_ref[...] = acc_ref[...]


def _sublane_multiple(dtype):
    """Row-tile alignment so sub-32-bit dtypes pack cleanly along sublanes."""
    item = jnp.dtype(dtype).itemsize
    return max(8, 32 // max(item, 1))  # f32 -> 8, bf16/f16 -> 16, int8/uint8 -> 32


def _choose_tile_rows(rows, base, max_rows):
    """Largest multiple of `base` <= max_rows that divides `rows` (rows % base == 0)."""
    cap = max(base, min(max_rows, rows))
    cap -= cap % base
    for t in range(cap, base - 1, -base):
        if rows % t == 0:
            return t
    return base


def dice_loss(y_pred, y_true, *, max_tile_rows=4096, row_splits=2):
    """y_pred: (N, C, H, W) logits, y_true: (N, H, W). Returns scalar f32 loss."""
    N, C, H, W = y_pred.shape
    assert C >= 2, "DiceLoss selects channel 1 of y_pred"
    assert y_true.shape == (N, H, W)
    row_splits = max(1, int(row_splits))

    if y_true.dtype == jnp.bool_:
        y_true = y_true.astype(jnp.uint8)

    HW = H * W
    L = _LANES
    base = max(_sublane_multiple(y_pred.dtype), _sublane_multiple(y_true.dtype))
    r0 = -(-HW // L)  # ceil(HW / 128)

    if HW % L == 0 and r0 % base == 0:
        # Zero-copy path: bitcast reshape, DMA only channel 1 straight from NCHW.
        splits = row_splits if r0 % (row_splits * base) == 0 else 1
        R = r0
        yp = y_pred.reshape(N, C, R, L)
        yt = y_true.reshape(N, R, L)
        ch = 1
    else:
        # Pad path: slice out channel 1 once, pad logits with a large negative
        # value (sigmoid -> 0) and targets with 0 so padding contributes nothing.
        splits = row_splits
        R = -(-r0 // (splits * base)) * (splits * base)
        pad = R * L - HW
        yp1 = y_pred[:, 1, :, :].reshape(N, HW)
        yp1 = jnp.pad(yp1, ((0, 0), (0, pad)), constant_values=-1e9)
        yp = yp1.reshape(N, 1, R, L)
        yt = jnp.pad(y_true.reshape(N, HW), ((0, 0), (0, pad))).reshape(N, R, L)
        ch = 0

    rows_per_split = R // splits
    tr = _choose_tile_rows(rows_per_split, base, max_tile_rows)
    tps = rows_per_split // tr
    grid = (N, splits, tps)

    kernel = functools.partial(_dice_partial_kernel, rows=tr)

    partials = pl.pallas_call(
        kernel,
        out_shape=jax.ShapeDtypeStruct((N, splits, 3, 8, L), jnp.float32),
        grid=grid,
        in_specs=[
            # Only channel `ch` of y_pred is ever fetched from HBM.
            pl.BlockSpec((None, None, tr, L),
                         lambda b, s, r: (b, ch, s * tps + r, 0)),
            pl.BlockSpec((None, tr, L),
                         lambda b, s, r: (b, s * tps + r, 0)),
        ],
        out_specs=pl.BlockSpec((None, None, 3, 8, L),
                               lambda b, s, r: (b, s, 0, 0, 0)),
        scratch_shapes=[pltpu.VMEM((3, 8, L), jnp.float32)],
        compiler_params=pltpu.CompilerParams(
            dimension_semantics=("parallel", "parallel", "arbitrary"),
            vmem_limit_bytes=48 * 1024 * 1024,  # safe headroom on v7x's 64 MiB VMEM
        ),
    )(yp, yt)

    # Tiny final reduction + dice formula in plain JAX (N * splits * 3 * 8 * 128 elems).
    sums = jnp.sum(partials, axis=(0, 1, 3, 4))  # (3,)
    smooth = 1.0
    intersection, sum_pred, sum_true = sums[0], sums[1], sums[2]
    dice = (2.0 * intersection + smooth) / (sum_pred + sum_true + smooth)
    return 1.0 - dice


def dice_loss_ref(y_pred, y_true):
    """Pure-JAX reference matching the PyTorch semantics."""
    smooth = 1.0
    p = jax.nn.sigmoid(y_pred.astype(jnp.float32))[:, 1, :, :]
    t = (y_true > 0.5).astype(jnp.float32)
    intersection = jnp.sum(p * t)
    union = jnp.sum(p) + jnp.sum(t)
    dice = (2.0 * intersection + smooth) / (union + smooth)
    return 1.0 - dice


if __name__ == "__main__":
    key = jax.random.PRNGKey(0)
    k1, k2 = jax.random.split(key)

    # Small shapes consistent with the module (batch=2, channels=4, spatial=16).
    N, C, H, W = 2, 4, 16, 16
    y_pred = jax.random.normal(k1, (N, C, H, W), dtype=jnp.float32)
    y_true = jax.random.uniform(k2, (N, H, W), dtype=jnp.float32)

    loss = jax.block_until_ready(dice_loss(y_pred, y_true))
    ref = jax.block_until_ready(dice_loss_ref(y_pred, y_true))
    assert jnp.allclose(loss, ref, atol=1e-5, rtol=1e-5), (loss, ref)

    # Also exercise the zero-copy (no-pad) path: H*W % 128 == 0 and rows % 8 == 0.
    H2 = W2 = 32
    yp2 = jax.random.normal(k1, (N, C, H2, W2), dtype=jnp.float32)
    yt2 = jax.random.uniform(k2, (N, H2, W2), dtype=jnp.float32)
    loss2 = jax.block_until_ready(dice_loss(yp2, yt2))
    ref2 = jax.block_until_ready(dice_loss_ref(yp2, yt2))
    assert jnp.allclose(loss2, ref2, atol=1e-5, rtol=1e-5), (loss2, ref2)

    print("KERNEL_OK")
</pallas_src>

<mosaic_0001>
module attributes {stable_mosaic.version = 11 : i64} {
  func.func @_dice_partial_kernel(%arg0: i32, %arg1: i32, %arg2: i32, %arg3: memref<1x1x8x128xf32, #tpu.memory_space<vmem>>, %arg4: memref<1x8x128xf32, #tpu.memory_space<vmem>>, %arg5: memref<1x1x3x8x128xf32, #tpu.memory_space<vmem>>, %arg6: memref<3x8x128xf32, #tpu.memory_space<vmem>>) attributes {dimension_semantics = [#tpu.dimension_semantics<parallel>, #tpu.dimension_semantics<parallel>, #tpu.dimension_semantics<arbitrary>], iteration_bounds = array<i64: 2, 2, 1>, scalar_prefetch = 0 : i64, scratch_operands = 1 : i64, tpu.core_type = #tpu.core_type<tc>, window_params = [{transform_indices = @transform_0, window_bounds = array<i64: 1, 1, 8, 128>}, {transform_indices = @transform_1, window_bounds = array<i64: 1, 8, 128>}, {transform_indices = @transform_2, window_bounds = array<i64: 1, 1, 3, 8, 128>}]} {
    %c0_i32 = arith.constant 0 : i32
    %0 = arith.cmpi eq, %arg2, %c0_i32 : i32
    %1 = arith.extui %0 : i1 to i32
    %c0_i32_0 = arith.constant 0 : i32
    %2 = arith.cmpi ne, %1, %c0_i32_0 : i32
    scf.if %2 {
      %cst_31 = arith.constant 0.000000e+00 : f32
      %46 = vector.broadcast %cst_31 : f32 to vector<3x8x128xf32>
      %c0_32 = arith.constant 0 : index
      %c0_33 = arith.constant 0 : index
      %c0_34 = arith.constant 0 : index
      %47 = vector.load %arg6[%c0_32, %c0_33, %c0_34] : memref<3x8x128xf32, #tpu.memory_space<vmem>>, vector<3x8x128xf32>
      tpu.vector_store %arg6[%c0_32, %c0_33, %c0_34], %46 {strides = array<i32>} : memref<3x8x128xf32, #tpu.memory_space<vmem>>, vector<3x8x128xf32>,
    } else {
    }
    %c0 = arith.constant 0 : index
    %c0_1 = arith.constant 0 : index
    %c0_2 = arith.constant 0 : index
    %c0_3 = arith.constant 0 : index
    %3 = vector.load %arg3[%c0, %c0_1, %c0_2, %c0_3] : memref<1x1x8x128xf32, #tpu.memory_space<vmem>>, vector<1x1x8x128xf32>
    %4 = vector.shape_cast %3 : vector<1x1x8x128xf32> to vector<8x128xf32>
    %cst = arith.constant 5.000000e-01 : f32
    %5 = vector.broadcast %cst : f32 to vector<8x128xf32>
    %6 = arith.mulf %5, %4 : vector<8x128xf32>
    %7 = math.tanh %6 : vector<8x128xf32>
    %cst_4 = arith.constant 5.000000e-01 : f32
    %8 = vector.broadcast %cst_4 : f32 to vector<8x128xf32>
    %9 = arith.mulf %8, %7 : vector<8x128xf32>
    %cst_5 = arith.constant 5.000000e-01 : f32
    %10 = vector.broadcast %cst_5 : f32 to vector<8x128xf32>
    %11 = arith.addf %9, %10 : vector<8x128xf32>
    %c0_6 = arith.constant 0 : index
    %c0_7 = arith.constant 0 : index
    %c0_8 = arith.constant 0 : index
    %12 = vector.load %arg4[%c0_6, %c0_7, %c0_8] : memref<1x8x128xf32, #tpu.memory_space<vmem>>, vector<1x8x128xf32>
    %13 = vector.shape_cast %12 : vector<1x8x128xf32> to vector<8x128xf32>
    %cst_9 = arith.constant 5.000000e-01 : f32
    %14 = vector.broadcast %cst_9 : f32 to vector<8x128xf32>
    %15 = arith.cmpf ogt, %13, %14 : vector<8x128xf32>
    %16 = arith.extui %15 : vector<8x128xi1> to vector<8x128xi32>
    %17 = arith.sitofp %16 : vector<8x128xi32> to vector<8x128xf32>
    %c0_10 = arith.constant 0 : index
    %c0_11 = arith.constant 0 : index
    %c0_12 = arith.constant 0 : index
    %18 = vector.load %arg6[%c0_10, %c0_11, %c0_12] : memref<3x8x128xf32, #tpu.memory_space<vmem>>, vector<1x8x128xf32>
    %19 = vector.shape_cast %18 : vector<1x8x128xf32> to vector<8x128xf32>
    %20 = arith.mulf %11, %17 : vector<8x128xf32>
    %21 = vector.shape_cast %20 : vector<8x128xf32> to vector<1x8x128xf32>
    %cst_13 = arith.constant dense<0.000000e+00> : vector<8x128xf32>
    %22 = vector.multi_reduction <add>, %21, %cst_13 [0] : vector<1x8x128xf32> to vector<8x128xf32>
    %23 = arith.addf %19, %22 : vector<8x128xf32>
    %c0_14 = arith.constant 0 : index
    %c0_15 = arith.constant 0 : index
    %c0_16 = arith.constant 0 : index
    %24 = vector.load %arg6[%c0_14, %c0_15, %c0_16] : memref<3x8x128xf32, #tpu.memory_space<vmem>>, vector<1x8x128xf32>
    %25 = vector.shape_cast %24 : vector<1x8x128xf32> to vector<8x128xf32>
    %26 = vector.shape_cast %23 : vector<8x128xf32> to vector<1x8x128xf32>
    tpu.vector_store %arg6[%c0_14, %c0_15, %c0_16], %26 {strides = array<i32>} : memref<3x8x128xf32, #tpu.memory_space<vmem>>, vector<1x8x128xf32>,
    %c1 = arith.constant 1 : index
    %c0_17 = arith.constant 0 : index
    %c0_18 = arith.constant 0 : index
    %27 = vector.load %arg6[%c1, %c0_17, %c0_18] : memref<3x8x128xf32, #tpu.memory_space<vmem>>, vector<1x8x128xf32>
    %28 = vector.shape_cast %27 : vector<1x8x128xf32> to vector<8x128xf32>
    %29 = vector.shape_cast %11 : vector<8x128xf32> to vector<1x8x128xf32>
    %cst_19 = arith.constant dense<0.000000e+00> : vector<8x128xf32>
    %30 = vector.multi_reduction <add>, %29, %cst_19 [0] : vector<1x8x128xf32> to vector<8x128xf32>
    %31 = arith.addf %28, %30 : vector<8x128xf32>
    %c1_20 = arith.constant 1 : index
    %c0_21 = arith.constant 0 : index
    %c0_22 = arith.constant 0 : index
    %32 = vector.load %arg6[%c1_20, %c0_21, %c0_22] : memref<3x8x128xf32, #tpu.memory_space<vmem>>, vector<1x8x128xf32>
    %33 = vector.shape_cast %32 : vector<1x8x128xf32> to vector<8x128xf32>
    %34 = vector.shape_cast %31 : vector<8x128xf32> to vector<1x8x128xf32>
    tpu.vector_store %arg6[%c1_20, %c0_21, %c0_22], %34 {strides = array<i32>} : memref<3x8x128xf32, #tpu.memory_space<vmem>>, vector<1x8x128xf32>,
    %c2 = arith.constant 2 : index
    %c0_23 = arith.constant 0 : index
    %c0_24 = arith.constant 0 : index
    %35 = vector.load %arg6[%c2, %c0_23, %c0_24] : memref<3x8x128xf32, #tpu.memory_space<vmem>>, vector<1x8x128xf32>
    %36 = vector.shape_cast %35 : vector<1x8x128xf32> to vector<8x128xf32>
    %37 = vector.shape_cast %17 : vector<8x128xf32> to vector<1x8x128xf32>
    %cst_25 = arith.constant dense<0.000000e+00> : vector<8x128xf32>
    %38 = vector.multi_reduction <add>, %37, %cst_25 [0] : vector<1x8x128xf32> to vector<8x128xf32>
    %39 = arith.addf %36, %38 : vector<8x128xf32>
    %c2_26 = arith.constant 2 : index
    %c0_27 = arith.constant 0 : index
    %c0_28 = arith.constant 0 : index
    %40 = vector.load %arg6[%c2_26, %c0_27, %c0_28] : memref<3x8x128xf32, #tpu.memory_space<vmem>>, vector<1x8x128xf32>
    %41 = vector.shape_cast %40 : vector<1x8x128xf32> to vector<8x128xf32>
    %42 = vector.shape_cast %39 : vector<8x128xf32> to vector<1x8x128xf32>
    tpu.vector_store %arg6[%c2_26, %c0_27, %c0_28], %42 {strides = array<i32>} : memref<3x8x128xf32, #tpu.memory_space<vmem>>, vector<1x8x128xf32>,
    %c0_i32_29 = arith.constant 0 : i32
    %43 = arith.cmpi eq, %arg2, %c0_i32_29 : i32
    %44 = arith.extui %43 : i1 to i32
    %c0_i32_30 = arith.constant 0 : i32
    %45 = arith.cmpi ne, %44, %c0_i32_30 : i32
    scf.if %45 {
      %c0_31 = arith.constant 0 : index
      %c0_32 = arith.constant 0 : index
      %c0_33 = arith.constant 0 : index
      %46 = vector.load %arg6[%c0_31, %c0_32, %c0_33] : memref<3x8x128xf32, #tpu.memory_space<vmem>>, vector<3x8x128xf32>
      %c0_34 = arith.constant 0 : index
      %c0_35 = arith.constant 0 : index
      %c0_36 = arith.constant 0 : index
      %c0_37 = arith.constant 0 : index
      %c0_38 = arith.constant 0 : index
      %47 = vector.load %arg5[%c0_34, %c0_35, %c0_36, %c0_37, %c0_38] : memref<1x1x3x8x128xf32, #tpu.memory_space<vmem>>, vector<1x1x3x8x128xf32>
      %48 = vector.shape_cast %47 : vector<1x1x3x8x128xf32> to vector<3x8x128xf32>
      %49 = vector.shape_cast %46 : vector<3x8x128xf32> to vector<1x1x3x8x128xf32>
      tpu.vector_store %arg5[%c0_34, %c0_35, %c0_36, %c0_37, %c0_38], %49 {strides = array<i32>} : memref<1x1x3x8x128xf32, #tpu.memory_space<vmem>>, vector<1x1x3x8x128xf32>,
    } else {
    }
    return
  }
  func.func @transform_0(%arg0: i32, %arg1: i32, %arg2: i32) -> (i32, i32, i32, i32) {
    %c1_i32 = arith.constant 1 : i32
    %0 = arith.muli %arg1, %c1_i32 : i32
    %1 = arith.addi %0, %arg2 : i32
    %c0_i32 = arith.constant 0 : i32
    %c0_i32_0 = arith.constant 0 : i32
    %c0_i32_1 = arith.constant 0 : i32
    return %arg0, %c0_i32, %1, %c0_i32_0 : i32, i32, i32, i32
  }
  func.func @transform_1(%arg0: i32, %arg1: i32, %arg2: i32) -> (i32, i32, i32) {
    %c1_i32 = arith.constant 1 : i32
    %0 = arith.muli %arg1, %c1_i32 : i32
    %1 = arith.addi %0, %arg2 : i32
    %c0_i32 = arith.constant 0 : i32
    %c0_i32_0 = arith.constant 0 : i32
    return %arg0, %1, %c0_i32 : i32, i32, i32
  }
  func.func @transform_2(%arg0: i32, %arg1: i32, %arg2: i32) -> (i32, i32, i32, i32, i32) {
    %c0_i32 = arith.constant 0 : i32
    %c0_i32_0 = arith.constant 0 : i32
    %c0_i32_1 = arith.constant 0 : i32
    %c0_i32_2 = arith.constant 0 : i32
    return %arg0, %arg1, %c0_i32, %c0_i32_0, %c0_i32_1 : i32, i32, i32, i32, i32
  }
}

</mosaic_0001>

<llo_original>
// kernel: tpu_custom_call.1
$region0: #{tpu_custom_call.1}
  #allocation0 [shape = 'u32[]', space=smem, size = 0x4, offset = 0x4, fixed_abs, tag = 'smem constant byte address 0x4 - core index']
  #allocation1 [shape = 'u32[72,128]{1,0:T(1,128)}', space=vmem, size = 0x9000, scoped, tag = 'internal scratch']
  #allocation2 [shape = 'f32[3,8,128]{2,1,0:T(8,128)}', space=vmem, size = 0x3000, scoped, tag = 'scratch operand']
  %s0 = inlined_call_operand.hbm [shape: f32[2,1,16,128], index: 0, kind: input, shape index: {}]
  %s1 = inlined_call_operand.hbm [shape: f32[2,16,128], index: 1, kind: input, shape index: {}]
  %s2 = inlined_call_operand.hbm [shape: f32[2,2,3,8,128], index: 2, kind: output, shape index: {}]
  %s3 = sld [smem:[#allocation0]]
  $region57: #{tpu_custom_call.1} parent=0
    _
  %s5 = ssub.s32 1, %s3
  %s6 = scalar_select 0, %s5, %s3
  $region1: #{tpu_custom_call.1} parent=0
    #allocation3 [shape = 'u8[8192]{0}', space=vmem, size = 0x2000, scoped, tag = 'input window, operand 0']
    #allocation4 [shape = 's32[2]{0}', space=sflag, size = 0x8, scoped, tag = 'scoped memory for tpu_custom_call.1']
    #allocation5 [shape = 's32[2]{0}', space=sflag, size = 0x8, scoped, tag = 'scoped memory for tpu_custom_call.1']
    #allocation6 [shape = 'u8[8192]{0}', space=vmem, size = 0x2000, scoped, tag = 'input window, operand 1']
    #allocation7 [shape = 's32[2]{0}', space=sflag, size = 0x8, scoped, tag = 'scoped memory for tpu_custom_call.1']
    #allocation8 [shape = 'u8[24576]{0}', space=vmem, size = 0x6000, scoped, tag = 'output window, operand 0']
    %7 = vsyncpa [#allocation4], 0
    %s8 = scalar_lea.sflag [#allocation4], 1
    %9 = vsyncpa %s8, 0
    %10 = vsyncpa [#allocation7], 0
    %s11 = scalar_lea.sflag [#allocation7], 1
    %12 = vsyncpa %s11, 0
    %13 = vsyncpa [#allocation5], 0
    %s14 = scalar_lea.sflag [#allocation5], 1
    %15 = vsyncpa %s14, 0
    loop: start=0, step=1, limit=6
    $region2: #{tpu_custom_call.1} parent=1 // loop_pre_header
      _
    $region3: #{tpu_custom_call.1} parent=1 // loop_header
      %s17 = sphi 0, %s21
      %p18 = scmp.ge.s32.totalorder %s17, 6
      %s24 = sphi 0, %s43
      %s25 = sphi 0, %s39
      %s26 = sphi 0, %s35
      %s27 = sphi 0, %s24
      %s28 = sphi 0, %s25
      %s29 = sphi 0, %s26
      %s30 = sphi 0, %s27
      %s31 = sphi 0, %s28
      %s32 = sphi 0, %s29
      %s50 = sphi 0, %s52
      %s53 = sphi 0, %s50
      %s54 = sphi 0, %s53
      %s70 = sphi 0, %s54
      %s80 = sphi 0, %s82
      %s83 = sphi 0, %s80
      %s84 = sphi 0, %s83
      %s100 = sphi 0, %s84
      %s108 = sphi 0, %s110
      %s111 = sphi 0, %s108
      %s112 = sphi 0, %s111
      %s128 = sphi 0, %s112
    $region4: #{tpu_custom_call.1} parent=1 // loop_header_branch
      %20 = sbr.rel (%p18) target = $region8
    $region5: #{tpu_custom_call.1} parent=1 // loop_body
      %s22 = ssub.s32 %s17, 1
      %s23 = ssub.s32 %s17, 2
      %s33 = sadd.s32 1, %s26
      %p34 = scmp.ge.s32.totalorder %s33, 1
      %s35 = scalar_select %p34, 0, %s33
      %s36 = sadd.s32 1, %s25
      %s37 = scalar_select %p34, %s36, %s25
      %p38 = scmp.ge.s32.totalorder %s37, 2
      %s39 = scalar_select %p38, 0, %s37
      %s40 = sadd.s32 1, %s24
      %s41 = scalar_select %p38, %s40, %s24
      %p42 = scmp.ge.s32.totalorder %s41, 2
      %s43 = scalar_select %p42, 0, %s41
      %s44 = sadd.s32 %s25, %s26
      %s45 = sadd.s32 %s39, %s35
      %s46 = ssub.s32 %s24, %s43
      %s47 = ssub.s32 %s44, %s45
      %s48 = sor.u32 %s46, %s47
      %p49 = scmp.eq.s32.totalorder %s48, 0
      %s51 = sadd.s32 %s50, 1
      %s52 = scalar_select %p49, %s50, %s51
      %p55 = pneg %p49
      %p56 = scmp.eq.s32.totalorder %s17, 3
      %p57 = por %p55, %p56
      %p58 = scmp.ne.s32.totalorder %s50, %s53
      %p59 = scmp.eq.s32.totalorder %s17, 0
      %p60 = por %p58, %p59
      %p61 = scmp.ne.s32.totalorder %s50, %s53
      %p62 = scmp.eq.s32.totalorder %s22, 3
      %p63 = por %p61, %p62
      %p64 = scmp.ne.s32.totalorder %s53, %s54
      %p65 = scmp.eq.s32.totalorder %s22, 0
      %p66 = por %p64, %p65
      %p67 = scmp.ne.s32.totalorder %s53, %s54
      %p68 = scmp.eq.s32.totalorder %s23, 3
      %p69 = por %p67, %p68
      %p71 = scmp.ne.s32.totalorder %s54, %s70
      %p72 = scmp.eq.s32.totalorder %s23, 0
      %p73 = por %p71, %p72
      %s74 = sadd.s32 %s25, %s26
      %s75 = sadd.s32 %s39, %s35
      %s76 = ssub.s32 %s24, %s43
      %s77 = ssub.s32 %s74, %s75
      %s78 = sor.u32 %s76, %s77
      %p79 = scmp.eq.s32.totalorder %s78, 0
      %s81 = sadd.s32 %s80, 1
      %s82 = scalar_select %p79, %s80, %s81
      %p85 = pneg %p79
      %p86 = scmp.eq.s32.totalorder %s17, 3
      %p87 = por %p85, %p86
      %p88 = scmp.ne.s32.totalorder %s80, %s83
      %p89 = scmp.eq.s32.totalorder %s17, 0
      %p90 = por %p88, %p89
      %p91 = scmp.ne.s32.totalorder %s80, %s83
      %p92 = scmp.eq.s32.totalorder %s22, 3
      %p93 = por %p91, %p92
      %p94 = scmp.ne.s32.totalorder %s83, %s84
      %p95 = scmp.eq.s32.totalorder %s22, 0
      %p96 = por %p94, %p95
      %p97 = scmp.ne.s32.totalorder %s83, %s84
      %p98 = scmp.eq.s32.totalorder %s23, 3
      %p99 = por %p97, %p98
      %p101 = scmp.ne.s32.totalorder %s84, %s100
      %p102 = scmp.eq.s32.totalorder %s23, 0
      %p103 = por %p101, %p102
      %s104 = ssub.s32 %s24, %s43
      %s105 = ssub.s32 %s25, %s39
      %s106 = sor.u32 %s104, %s105
      %p107 = scmp.eq.s32.totalorder %s106, 0
      %s109 = sadd.s32 %s108, 1
      %s110 = scalar_select %p107, %s108, %s109
      %p113 = pneg %p107
      %p114 = scmp.eq.s32.totalorder %s17, 3
      %p115 = por %p113, %p114
      %p116 = scmp.ne.s32.totalorder %s108, %s111
      %p117 = scmp.eq.s32.totalorder %s17, 0
      %p118 = por %p116, %p117
      %p119 = scmp.ne.s32.totalorder %s108, %s111
      %p120 = scmp.eq.s32.totalorder %s22, 3
      %p121 = por %p119, %p120
      %p122 = scmp.ne.s32.totalorder %s111, %s112
      %p123 = scmp.eq.s32.totalorder %s22, 0
      %p124 = por %p122, %p123
      %p125 = scmp.ne.s32.totalorder %s111, %s112
      %p126 = scmp.eq.s32.totalorder %s23, 3
      %p127 = por %p125, %p126
      %p129 = scmp.ne.s32.totalorder %s112, %s128
      %p130 = scmp.eq.s32.totalorder %s23, 0
      %p131 = por %p129, %p130
      %p132 = scmp.le.s32.totalorder 1, %s17
      %p133 = scmp.lt.s32.totalorder %s17, 5
      %p134 = pnand %p132, %p133
      %p135 = pneg %p134
      // Predicated region
      $region9: #{tpu_custom_call.1} parent=5 // pred_check
        _
      $region10: #{tpu_custom_call.1} parent=5 // pred_check_branch
        %137 = sbr.rel (%p134) target = $region12
      $region11: #{tpu_custom_call.1} parent=5 // pred_region
        %s138 = ssub.s32 %s17, 1
      $region12: #{tpu_custom_call.1} parent=5 // pred_fallthru
        _
      %p139 = scmp.lt.s32.totalorder %s17, 4
      // Predicated region
      $region13: #{tpu_custom_call.1} parent=5 // pred_check
        %p140 = pneg %p139
      $region14: #{tpu_custom_call.1} parent=5 // pred_check_branch
        %142 = sbr.rel (%p140) target = $region16
      $region15: #{tpu_custom_call.1} parent=5 // pred_region
        // Predicated region
        $region17: #{tpu_custom_call.1} parent=15 // pred_check
          %p143 = pneg %p60
        $region18: #{tpu_custom_call.1} parent=15 // pred_check_branch
          %145 = sbr.rel (%p143) target = $region20
        $region19: #{tpu_custom_call.1} parent=15 // pred_region
          %s146 = sand.u32 %s50, 1
          %s147 = scalar_lea.sflag [#allocation4], %s146
          %s148 = sand.u32 %s50, 1
          %s149 = smul.addr %s148, 8
          %s150 = scalar_lea.vmem [#allocation3], %s149
          %s151 = sadd.s32 %s25, %s26
          %153 = vsyncadd %s147, 0
          %s154 = smul.addr %s24, 2
          %s155 = sadd.s32 %s151, %s154
          %s156 = smul.addr %s155, 8
          %s157 = scalar_lea.hbm %s0, %s156
          %s159 = sshll.u32 %s157, 4
          %s160 = int_to_ptr.hbm [resolvable:$true] %s159
          %s161 = sshll.u32 %s150, 4
          %s162 = int_to_ptr.vmem [resolvable:$true] %s161
          %164 = dma.hbm_to_vmem [thread:$0]  %s160, 128, %s162, %s147
        $region20: #{tpu_custom_call.1} parent=15 // pred_fallthru
          _
        // Predicated region
        $region21: #{tpu_custom_call.1} parent=15 // pred_check
          %p165 = pneg %p90
        $region22: #{tpu_custom_call.1} parent=15 // pred_check_branch
          %167 = sbr.rel (%p165) target = $region24
        $region23: #{tpu_custom_call.1} parent=15 // pred_region
          %s168 = sand.u32 %s80, 1
          %s169 = scalar_lea.sflag [#allocation7], %s168
          %s170 = sand.u32 %s80, 1
          %s171 = smul.addr %s170, 8
          %s172 = scalar_lea.vmem [#allocation6], %s171
          %s173 = sadd.s32 %s25, %s26
          %175 = vsyncadd %s169, 0
          %s176 = smul.addr %s24, 2
          %s177 = sadd.s32 %s173, %s176
          %s178 = smul.addr %s177, 8
          %s179 = scalar_lea.hbm %s1, %s178
          %s181 = sshll.u32 %s179, 4
          %s182 = int_to_ptr.hbm [resolvable:$true] %s181
          %s183 = sshll.u32 %s172, 4
          %s184 = int_to_ptr.vmem [resolvable:$true] %s183
          %186 = dma.hbm_to_vmem [thread:$0]  %s182, 128, %s184, %s169
        $region24: #{tpu_custom_call.1} parent=15 // pred_fallthru
          _
      $region16: #{tpu_custom_call.1} parent=5 // pred_fallthru
        _
      %p187 = scmp.le.s32.totalorder 1, %s17
      %p188 = scmp.lt.s32.totalorder %s17, 5
      %p189 = pnand %p187, %p188
      %p190 = pneg %p189
      // Predicated region
      $region25: #{tpu_custom_call.1} parent=5 // pred_check
        _
      $region26: #{tpu_custom_call.1} parent=5 // pred_check_branch
        %192 = sbr.rel (%p189) target = $region28
      $region27: #{tpu_custom_call.1} parent=5 // pred_region
        %s193 = ssub.s32 %s17, 1
        %s194 = sand.u32 %s53, 1
        %s195 = scalar_lea.sflag [#allocation4], %s194
        %s196 = sand.u32 %s53, 1
        %s197 = smul.addr %s196, 8
        %s198 = scalar_lea.vmem [#allocation3], %s197
        // Predicated region
        $region29: #{tpu_custom_call.1} parent=27 // pred_check
          %p199 = pneg %p66
        $region30: #{tpu_custom_call.1} parent=27 // pred_check_branch
          %201 = sbr.rel (%p199) target = $region32
        $region31: #{tpu_custom_call.1} parent=27 // pred_region
          %203 = dma.done %s195, 128
        $region32: #{tpu_custom_call.1} parent=27 // pred_fallthru
          _
        %s204 = sand.u32 %s83, 1
        %s205 = scalar_lea.sflag [#allocation7], %s204
        %s206 = sand.u32 %s83, 1
        %s207 = smul.addr %s206, 8
        %s208 = scalar_lea.vmem [#allocation6], %s207
        // Predicated region
        $region33: #{tpu_custom_call.1} parent=27 // pred_check
          %p209 = pneg %p96
        $region34: #{tpu_custom_call.1} parent=27 // pred_check_branch
          %211 = sbr.rel (%p209) target = $region36
        $region35: #{tpu_custom_call.1} parent=27 // pred_region
          %213 = dma.done %s205, 128
        $region36: #{tpu_custom_call.1} parent=27 // pred_fallthru
          _
        %s214 = sand.u32 %s53, 1
        %s215 = scalar_lea.sflag [#allocation4], %s214
        %s216 = sand.u32 %s53, 1
        %s217 = smul.addr %s216, 8
        %s218 = scalar_lea.vmem [#allocation3], %s217
        %p219 = pneg %p66
        %p220 = pneg %p63
        %s221 = sand.u32 %s83, 1
        %s222 = scalar_lea.sflag [#allocation7], %s221
        %s223 = sand.u32 %s83, 1
        %s224 = smul.addr %s223, 8
        %s225 = scalar_lea.vmem [#allocation6], %s224
        %p226 = pneg %p96
        %p227 = pneg %p93
        %p228 = pneg %p124
        %p229 = pneg %p121
        %s230 = sand.u32 %s111, 1
        %s231 = scalar_lea.sflag [#allocation5], %s230
        %s232 = sand.u32 %s111, 1
        %s233 = smul.addr %s232, 24
        %s234 = scalar_lea.vmem [#allocation8], %s233
        %s235 = sadd.s32 %s28, %s29
        %s236 = sadd.s32 %s28, %s29
        %p237 = scmp.eq.s32.totalorder %s29, 0
        // Predicated region
        $region37: #{tpu_custom_call.1} parent=27 // pred_check
          %p238 = pneg %p237
        $region38: #{tpu_custom_call.1} parent=27 // pred_check_branch
          %240 = sbr.rel (%p238) target = $region40
        $region39: #{tpu_custom_call.1} parent=27 // pred_region
          %241 = vst [vmem:[#allocation2] sm:$0xff] 0.0
          %242 = vst [vmem:[#allocation2 + $0x8] sm:$0xff] 0.0
          %243 = vst [vmem:[#allocation2 + $0x10] sm:$0xff] 0.0
        $region40: #{tpu_custom_call.1} parent=27 // pred_fallthru
          _
        %v244 = vld [vmem:[%s198] sm:$0xff]
        %v245 = vmul.f32 %v244, 0.5
        %v246 = vtanh.pop %v245
        %v247 = vmul.f32 %v246, 0.5
        %v248 = vadd.f32 %v247, 0.5
        %v249 = vld [vmem:[%s208] sm:$0xff]
        %vm250 = vcmp.gt.f32.partialorder %v249, 0.5
        %v251 = vsel %vm250, 1, 0
        %v252 = vcvt.s32.f32 %v251
        %v253 = vld [vmem:[#allocation2] sm:$0xff]
        %v254 = vmul.f32 %v248, %v252
        %v255 = vadd.f32 %v254, 0.0
        %v256 = vadd.f32 %v253, %v255
        %257 = vst [vmem:[#allocation2] sm:$0xff] %v256
        %s258 = scalar_lea.vmem [#allocation2], 8
        %v259 = vld [vmem:[%s258] sm:$0xff]
        %v260 = vadd.f32 %v248, 0.0
        %v261 = vadd.f32 %v259, %v260
        %262 = vst [vmem:[%s258] sm:$0xff] %v261
        %s263 = scalar_lea.vmem [#allocation2], 16
        %v264 = vld [vmem:[%s263] sm:$0xff]
        %v265 = vadd.f32 %v252, 0.0
        %v266 = vadd.f32 %v264, %v265
        %267 = vst [vmem:[%s263] sm:$0xff] %v266
        // Predicated region
        $region41: #{tpu_custom_call.1} parent=27 // pred_check
          %p268 = pneg %p237
        $region42: #{tpu_custom_call.1} parent=27 // pred_check_branch
          %270 = sbr.rel (%p268) target = $region44
        $region43: #{tpu_custom_call.1} parent=27 // pred_region
          %v271 = vld [vmem:[#allocation2] sm:$0xff]
          %v272 = vld [vmem:[#allocation2 + $0x8] sm:$0xff]
          %v273 = vld [vmem:[#allocation2 + $0x10] sm:$0xff]
          %274 = vst [vmem:[%s234] sm:$0xff] %v271
          %275 = vst [vmem:[%s234 + $0x8] sm:$0xff] %v272
          %276 = vst [vmem:[%s234 + $0x10] sm:$0xff] %v273
        $region44: #{tpu_custom_call.1} parent=27 // pred_fallthru
          _
        %s277 = sand.u32 %s111, 1
        %s278 = scalar_lea.sflag [#allocation5], %s277
        %s279 = sand.u32 %s111, 1
        %s280 = smul.addr %s279, 24
        %s281 = scalar_lea.vmem [#allocation8], %s280
        // Predicated region
        $region45: #{tpu_custom_call.1} parent=27 // pred_check
          %p282 = pneg %p121
        $region46: #{tpu_custom_call.1} parent=27 // pred_check_branch
          %284 = sbr.rel (%p282) target = $region48
        $region47: #{tpu_custom_call.1} parent=27 // pred_region
          %286 = vsyncadd %s278, 0
          %s287 = smul.addr %s28, 3
          %s288 = smul.addr %s27, 6
          %s289 = sadd.s32 %s287, %s288
          %s290 = smul.addr %s289, 8
          %s291 = scalar_lea.hbm %s2, %s290
          %s292 = sshll.u32 %s281, 4
          %s293 = int_to_ptr.vmem [resolvable:$true] %s292
          %s294 = sshll.u32 %s291, 4
          %s295 = int_to_ptr.hbm [resolvable:$true] %s294
          %300 = dma.vmem_to_hbm [thread:$0]  %s293, 384, %s295, %s278, 128, 128, 8
        $region48: #{tpu_custom_call.1} parent=27 // pred_fallthru
          _
      $region28: #{tpu_custom_call.1} parent=5 // pred_fallthru
        _
      %p301 = scmp.le.s32.totalorder 2, %s17
      // Predicated region
      $region49: #{tpu_custom_call.1} parent=5 // pred_check
        %p302 = pneg %p301
      $region50: #{tpu_custom_call.1} parent=5 // pred_check_branch
        %304 = sbr.rel (%p302) target = $region52
      $region51: #{tpu_custom_call.1} parent=5 // pred_region
        %s305 = ssub.s32 %s17, 2
        // Predicated region
        $region53: #{tpu_custom_call.1} parent=51 // pred_check
          %p306 = pneg %p127
        $region54: #{tpu_custom_call.1} parent=51 // pred_check_branch
          %308 = sbr.rel (%p306) target = $region56
        $region55: #{tpu_custom_call.1} parent=51 // pred_region
          %s309 = sand.u32 %s112, 1
          %s310 = scalar_lea.sflag [#allocation5], %s309
          %s311 = sand.u32 %s112, 1
          %s312 = smul.addr %s311, 24
          %s313 = scalar_lea.vmem [#allocation8], %s312
          %315 = dma.done %s310, 384
        $region56: #{tpu_custom_call.1} parent=51 // pred_fallthru
          _
      $region52: #{tpu_custom_call.1} parent=5 // pred_fallthru
        _
    $region6: #{tpu_custom_call.1} parent=1 // loop_footer
      %s21 = sadd.s32 1, %s17
    $region7: #{tpu_custom_call.1} parent=1 // loop_footer_branch
      %16 = sbr.rel target = $region3
    $region8: #{tpu_custom_call.1} parent=1 // loop_exit
      _
    %316 = vsyncpa [#allocation4], 1
    %s317 = scalar_lea.sflag [#allocation4], 1
    %318 = vsyncpa %s317, 1
    %319 = vsyncpa [#allocation7], 1
    %s320 = scalar_lea.sflag [#allocation7], 1
    %321 = vsyncpa %s320, 1
    %322 = vsyncpa [#allocation5], 1
    %s323 = scalar_lea.sflag [#allocation5], 1
    %324 = vsyncpa %s323, 1

</llo_original>
